<compile_context>
chip_gen: v7x
topology: tpu7x:2x2x1
jax: 0.10.0
libtpu: 0.0.40
codegen_flags: <defaults>
</compile_context>

<pallas_src>
import jax
import jax.numpy as jnp
from jax.experimental import pallas as pl
from jax.experimental.pallas import tpu as pltpu


def _round_up(x, m):
    return ((x + m - 1) // m) * m


def _pick_tile_rows(n_rows, n_cols):
    # ~2 MiB per (tile_n, C) f32 working tile keeps double-buffered inputs plus
    # in-kernel f32 temporaries comfortably inside a 32 MiB scoped-VMEM budget
    # (v7x-safe), while still being large enough to hide DMA latency.
    budget_rows = (2 * 1024 * 1024) // max(1, n_cols * 4)
    t = max(8, min(512, (budget_rows // 8) * 8))
    return min(t, _round_up(n_rows, 8))


def _log_softmax(x):
    m = jnp.max(x, axis=-1, keepdims=True)
    s = x - m
    return s - jnp.log(jnp.sum(jnp.exp(s), axis=-1, keepdims=True))


def _js_kernel(p_ref, q_ref, out_ref, acc_ref):
    i = pl.program_id(0)

    @pl.when(i == 0)
    def _():
        acc_ref[...] = jnp.zeros_like(acc_ref)

    # Cast in-kernel: bf16 inputs move over HBM at native width.
    p_logits = p_ref[...].astype(jnp.float32)
    q_logits = q_ref[...].astype(jnp.float32)
    m_logits = 0.5 * (p_logits + q_logits)

    p_log = _log_softmax(p_logits)
    q_log = _log_softmax(q_logits)
    m_log = _log_softmax(m_logits)

    contrib = (jnp.exp(p_log) * (p_log - m_log)
               + jnp.exp(q_log) * (q_log - m_log))

    # Per-row partial sums accumulated across grid steps; the expensive
    # cross-sublane collapse happens exactly once, at finalize.
    acc_ref[...] += jnp.sum(contrib, axis=-1, keepdims=True)

    @pl.when(i == pl.num_programs(0) - 1)
    def _():
        out_ref[0, 0] = 0.5 * jnp.sum(acc_ref[...])


def js_divergence(P, Q, *, tile_n=None):
    """Jensen-Shannon divergence matching the PyTorch module. Returns f32 scalar."""
    assert P.shape == Q.shape, "P and Q must have the same shape"
    C = P.shape[-1]
    P2 = P.reshape(-1, C)
    Q2 = Q.reshape(-1, C)
    N = P2.shape[0]

    if tile_n is None:
        tn = _pick_tile_rows(N, C)
    else:
        tn = min(tile_n, _round_up(N, 8))
    tn = max(8, (tn // 8) * 8)

    n_pad = _round_up(N, tn)
    if n_pad != N:
        # Zero-padded rows contribute exactly 0: P = Q = M = 0 row-wise, so all
        # three log-softmaxes coincide and both KL terms vanish.
        pad = ((0, n_pad - N), (0, 0))
        P2 = jnp.pad(P2, pad)
        Q2 = jnp.pad(Q2, pad)

    grid = (n_pad // tn,)
    out = pl.pallas_call(
        _js_kernel,
        out_shape=jax.ShapeDtypeStruct((1, 1), jnp.float32),
        grid_spec=pltpu.PrefetchScalarGridSpec(
            num_scalar_prefetch=0,
            grid=grid,
            in_specs=[
                pl.BlockSpec((tn, C), lambda i: (i, 0)),   # P tile
                pl.BlockSpec((tn, C), lambda i: (i, 0)),   # Q tile
            ],
            out_specs=pl.BlockSpec(memory_space=pltpu.MemorySpace.SMEM),
            scratch_shapes=[pltpu.VMEM((tn, 1), jnp.float32)],
        ),
        compiler_params=pltpu.CompilerParams(
            dimension_semantics=("arbitrary",),        # grid axis is a reduction
            vmem_limit_bytes=32 * 1024 * 1024,         # safe on v5e/v6e/v7x
        ),
    )(P2, Q2)
    return out[0, 0]


def _reference(P, Q):
    def kld(a, b):
        p = jax.nn.softmax(a, axis=-1)
        return jnp.sum(p * (jax.nn.log_softmax(a, axis=-1)
                            - jax.nn.log_softmax(b, axis=-1)))
    M = 0.5 * (P + Q)
    return 0.5 * (kld(P, M) + kld(Q, M))


if __name__ == "__main__":
    key = jax.random.PRNGKey(0)
    k1, k2 = jax.random.split(key)

    # Small deterministic logits: 13 rows (exercises zero-padding to a tile
    # multiple), 128 classes (lane-dense last axis).
    N, C = 13, 128
    P = jax.random.normal(k1, (N, C), dtype=jnp.float32)
    Q = jax.random.normal(k2, (N, C), dtype=jnp.float32)

    # tile_n=8 -> 2-step grid, exercising init/accumulate/finalize.
    js = js_divergence(P, Q, tile_n=8)
    jax.block_until_ready(js)

    ref = _reference(P, Q)
    assert jnp.allclose(js, ref, rtol=1e-5, atol=1e-5), (js, ref)

    # bf16 inputs: in-kernel f32 up-cast, native-width HBM reads.
    Pb, Qb = P.astype(jnp.bfloat16), Q.astype(jnp.bfloat16)
    js_bf16 = js_divergence(Pb, Qb)
    jax.block_until_ready(js_bf16)
    ref_bf16 = _reference(Pb.astype(jnp.float32), Qb.astype(jnp.float32))
    assert jnp.allclose(js_bf16, ref_bf16, rtol=1e-3, atol=1e-3), (js_bf16, ref_bf16)

    print("KERNEL_OK")
</pallas_src>

<mosaic_0001>
module attributes {stable_mosaic.version = 11 : i64} {
  func.func @_js_kernel(%arg0: i32, %arg1: memref<8x128xf32, #tpu.memory_space<vmem>>, %arg2: memref<8x128xf32, #tpu.memory_space<vmem>>, %arg3: memref<1x1xf32, #tpu.memory_space<smem>>, %arg4: memref<8x1xf32, #tpu.memory_space<vmem>>) attributes {dimension_semantics = [#tpu.dimension_semantics<arbitrary>], iteration_bounds = array<i64: 2>, scalar_prefetch = 0 : i64, scratch_operands = 1 : i64, tpu.core_type = #tpu.core_type<tc>, window_params = [{transform_indices = @transform_0, window_bounds = array<i64: 8, 128>}, {transform_indices = @transform_1, window_bounds = array<i64: 8, 128>}, {transform_indices = @transform_2, window_bounds = array<i64: 1, 1>}]} {
    %c0_i32 = arith.constant 0 : i32
    %0 = arith.cmpi eq, %arg0, %c0_i32 : i32
    %1 = arith.extui %0 : i1 to i32
    %c0_i32_0 = arith.constant 0 : i32
    %2 = arith.cmpi ne, %1, %c0_i32_0 : i32
    scf.if %2 {
      %cst_16 = arith.constant 0.000000e+00 : f32
      %53 = vector.broadcast %cst_16 : f32 to vector<8x1xf32>
      %c0_17 = arith.constant 0 : index
      %c0_18 = arith.constant 0 : index
      %54 = vector.load %arg4[%c0_17, %c0_18] : memref<8x1xf32, #tpu.memory_space<vmem>>, vector<8x1xf32>
      tpu.vector_store %arg4[%c0_17, %c0_18], %53 {strides = array<i32>} : memref<8x1xf32, #tpu.memory_space<vmem>>, vector<8x1xf32>,
    } else {
    }
    %c0 = arith.constant 0 : index
    %c0_1 = arith.constant 0 : index
    %3 = vector.load %arg1[%c0, %c0_1] : memref<8x128xf32, #tpu.memory_space<vmem>>, vector<8x128xf32>
    %c0_2 = arith.constant 0 : index
    %c0_3 = arith.constant 0 : index
    %4 = vector.load %arg2[%c0_2, %c0_3] : memref<8x128xf32, #tpu.memory_space<vmem>>, vector<8x128xf32>
    %5 = arith.addf %3, %4 : vector<8x128xf32>
    %cst = arith.constant 5.000000e-01 : f32
    %6 = vector.broadcast %cst : f32 to vector<8x128xf32>
    %7 = arith.mulf %6, %5 : vector<8x128xf32>
    %cst_4 = arith.constant dense<0xFF800000> : vector<8xf32>
    %8 = vector.multi_reduction <maximumf>, %3, %cst_4 [1] : vector<8x128xf32> to vector<8xf32>
    %9 = vector.shape_cast %8 : vector<8xf32> to vector<8x1xf32>
    %10 = vector.broadcast %9 : vector<8x1xf32> to vector<8x128xf32>
    %11 = arith.subf %3, %10 : vector<8x128xf32>
    %12 = math.exp %11 : vector<8x128xf32>
    %cst_5 = arith.constant dense<0.000000e+00> : vector<8xf32>
    %13 = vector.multi_reduction <add>, %12, %cst_5 [1] : vector<8x128xf32> to vector<8xf32>
    %14 = vector.shape_cast %13 : vector<8xf32> to vector<8x1xf32>
    %15 = math.log %14 : vector<8x1xf32>
    %16 = vector.broadcast %15 : vector<8x1xf32> to vector<8x128xf32>
    %17 = arith.subf %11, %16 : vector<8x128xf32>
    %cst_6 = arith.constant dense<0xFF800000> : vector<8xf32>
    %18 = vector.multi_reduction <maximumf>, %4, %cst_6 [1] : vector<8x128xf32> to vector<8xf32>
    %19 = vector.shape_cast %18 : vector<8xf32> to vector<8x1xf32>
    %20 = vector.broadcast %19 : vector<8x1xf32> to vector<8x128xf32>
    %21 = arith.subf %4, %20 : vector<8x128xf32>
    %22 = math.exp %21 : vector<8x128xf32>
    %cst_7 = arith.constant dense<0.000000e+00> : vector<8xf32>
    %23 = vector.multi_reduction <add>, %22, %cst_7 [1] : vector<8x128xf32> to vector<8xf32>
    %24 = vector.shape_cast %23 : vector<8xf32> to vector<8x1xf32>
    %25 = math.log %24 : vector<8x1xf32>
    %26 = vector.broadcast %25 : vector<8x1xf32> to vector<8x128xf32>
    %27 = arith.subf %21, %26 : vector<8x128xf32>
    %cst_8 = arith.constant dense<0xFF800000> : vector<8xf32>
    %28 = vector.multi_reduction <maximumf>, %7, %cst_8 [1] : vector<8x128xf32> to vector<8xf32>
    %29 = vector.shape_cast %28 : vector<8xf32> to vector<8x1xf32>
    %30 = vector.broadcast %29 : vector<8x1xf32> to vector<8x128xf32>
    %31 = arith.subf %7, %30 : vector<8x128xf32>
    %32 = math.exp %31 : vector<8x128xf32>
    %cst_9 = arith.constant dense<0.000000e+00> : vector<8xf32>
    %33 = vector.multi_reduction <add>, %32, %cst_9 [1] : vector<8x128xf32> to vector<8xf32>
    %34 = vector.shape_cast %33 : vector<8xf32> to vector<8x1xf32>
    %35 = math.log %34 : vector<8x1xf32>
    %36 = vector.broadcast %35 : vector<8x1xf32> to vector<8x128xf32>
    %37 = arith.subf %31, %36 : vector<8x128xf32>
    %38 = math.exp %17 : vector<8x128xf32>
    %39 = arith.subf %17, %37 : vector<8x128xf32>
    %40 = arith.mulf %38, %39 : vector<8x128xf32>
    %41 = math.exp %27 : vector<8x128xf32>
    %42 = arith.subf %27, %37 : vector<8x128xf32>
    %43 = arith.mulf %41, %42 : vector<8x128xf32>
    %44 = arith.addf %40, %43 : vector<8x128xf32>
    %c0_10 = arith.constant 0 : index
    %c0_11 = arith.constant 0 : index
    %45 = vector.load %arg4[%c0_10, %c0_11] : memref<8x1xf32, #tpu.memory_space<vmem>>, vector<8x1xf32>
    %cst_12 = arith.constant dense<0.000000e+00> : vector<8xf32>
    %46 = vector.multi_reduction <add>, %44, %cst_12 [1] : vector<8x128xf32> to vector<8xf32>
    %47 = vector.shape_cast %46 : vector<8xf32> to vector<8x1xf32>
    %48 = arith.addf %45, %47 : vector<8x1xf32>
    %c0_13 = arith.constant 0 : index
    %c0_14 = arith.constant 0 : index
    %49 = vector.load %arg4[%c0_13, %c0_14] : memref<8x1xf32, #tpu.memory_space<vmem>>, vector<8x1xf32>
    tpu.vector_store %arg4[%c0_13, %c0_14], %48 {strides = array<i32>} : memref<8x1xf32, #tpu.memory_space<vmem>>, vector<8x1xf32>,
    %c1_i32 = arith.constant 1 : i32
    %50 = arith.cmpi eq, %arg0, %c1_i32 : i32
    %51 = arith.extui %50 : i1 to i32
    %c0_i32_15 = arith.constant 0 : i32
    %52 = arith.cmpi ne, %51, %c0_i32_15 : i32
    scf.if %52 {
      %c0_16 = arith.constant 0 : index
      %c0_17 = arith.constant 0 : index
      %53 = vector.load %arg4[%c0_16, %c0_17] : memref<8x1xf32, #tpu.memory_space<vmem>>, vector<8x1xf32>
      %54 = vector.shape_cast %53 : vector<8x1xf32> to vector<1x8x1xf32>
      %cst_18 = arith.constant dense<0.000000e+00> : vector<1xf32>
      %55 = vector.multi_reduction <add>, %54, %cst_18 [1, 2] : vector<1x8x1xf32> to vector<1xf32>
      %56 = vector.shape_cast %55 : vector<1xf32> to vector<1x1x1xf32>
      %57 = vector.extract %56[0, 0, 0] : f32 from vector<1x1x1xf32>
      %cst_19 = arith.constant 5.000000e-01 : f32
      %58 = arith.mulf %cst_19, %57 : f32
      %c0_20 = arith.constant 0 : index
      %c0_21 = arith.constant 0 : index
      %59 = memref.load %arg3[%c0_20, %c0_21] : memref<1x1xf32, #tpu.memory_space<smem>>
      memref.store %58, %arg3[%c0_20, %c0_21] : memref<1x1xf32, #tpu.memory_space<smem>>
    } else {
    }
    return
  }
  func.func @transform_0(%arg0: i32) -> (i32, i32) {
    %c0_i32 = arith.constant 0 : i32
    %c0_i32_0 = arith.constant 0 : i32
    return %arg0, %c0_i32 : i32, i32
  }
  func.func @transform_1(%arg0: i32) -> (i32, i32) {
    %c0_i32 = arith.constant 0 : i32
    %c0_i32_0 = arith.constant 0 : i32
    return %arg0, %c0_i32 : i32, i32
  }
  func.func @transform_2(%arg0: i32) -> (i32, i32) {
    %c0_i32 = arith.constant 0 : i32
    %c0_i32_0 = arith.constant 0 : i32
    %c0_i32_1 = arith.constant 0 : i32
    return %c0_i32, %c0_i32_0 : i32, i32
  }
}

</mosaic_0001>

<llo_original>
// kernel: tpu_custom_call.1
$region0: #{tpu_custom_call.1}
  #allocation0 [shape = 'u32[]', space=smem, size = 0x4, offset = 0x4, fixed_abs, tag = 'smem constant byte address 0x4 - core index']
  #allocation1 [shape = 'u32[144,128]{1,0:T(1,128)}', space=vmem, size = 0x12000, scoped, tag = 'internal scratch']
  #allocation2 [shape = 'f32[8,1]{1,0:T(8,128)}', space=vmem, size = 0x1000, scoped, tag = 'scratch operand']
  %s0 = inlined_call_operand.hbm [shape: f32[16,128], index: 0, kind: input, shape index: {}]
  %s1 = inlined_call_operand.hbm [shape: f32[16,128], index: 1, kind: input, shape index: {}]
  %s2 = inlined_call_operand.hbm [shape: f32[1,1], index: 2, kind: output, shape index: {}]
  %s3 = sld [smem:[#allocation0]]
  $region57: #{tpu_custom_call.1} parent=0
    _
  %s5 = ssub.s32 1, %s3
  %s6 = scalar_select 0, %s5, %s3
  $region1: #{tpu_custom_call.1} parent=0
    #allocation3 [shape = 'u8[8192]{0}', space=vmem, size = 0x2000, scoped, tag = 'input window, operand 0']
    #allocation4 [shape = 's32[2]{0}', space=sflag, size = 0x8, scoped, tag = 'scoped memory for tpu_custom_call.1']
    #allocation5 [shape = 's32[2]{0}', space=sflag, size = 0x8, scoped, tag = 'scoped memory for tpu_custom_call.1']
    #allocation6 [shape = 'u8[8192]{0}', space=vmem, size = 0x2000, scoped, tag = 'input window, operand 1']
    #allocation7 [shape = 's32[2]{0}', space=sflag, size = 0x8, scoped, tag = 'scoped memory for tpu_custom_call.1']
    #allocation8 [shape = 'u8[512]{0}', space=smem, size = 0x200, scoped, tag = 'output window, operand 0, single buffered']
    %7 = vsyncpa [#allocation4], 0
    %s8 = scalar_lea.sflag [#allocation4], 1
    %9 = vsyncpa %s8, 0
    %10 = vsyncpa [#allocation7], 0
    %s11 = scalar_lea.sflag [#allocation7], 1
    %12 = vsyncpa %s11, 0
    %13 = vsyncpa [#allocation5], 0
    loop: start=0, step=1, limit=4
    $region2: #{tpu_custom_call.1} parent=1 // loop_pre_header
      _
    $region3: #{tpu_custom_call.1} parent=1 // loop_header
      %s15 = sphi 0, %s19
      %p16 = scmp.ge.s32.totalorder %s15, 4
      %s25 = sphi 0, %s27
      %s28 = sphi 0, %s25
      %s29 = sphi 0, %s28
      %s45 = sphi 0, %s29
      %s51 = sphi 0, %s53
      %s54 = sphi 0, %s51
      %s55 = sphi 0, %s54
      %s71 = sphi 0, %s55
      %s75 = sphi 0, %s75
      %s77 = sphi 0, %s75
      %s78 = sphi 0, %s77
      %s92 = sphi 0, %s78
    $region4: #{tpu_custom_call.1} parent=1 // loop_header_branch
      %18 = sbr.rel (%p16) target = $region8
    $region5: #{tpu_custom_call.1} parent=1 // loop_body
      %s20 = ssub.s32 %s15, 1
      %s21 = ssub.s32 %s15, 2
      %s22 = sadd.s32 %s15, 1
      %s23 = ssub.s32 %s15, %s22
      %p24 = scmp.eq.s32.totalorder %s23, 0
      %s26 = sadd.s32 %s25, 1
      %s27 = scalar_select %p24, %s25, %s26
      %p30 = pneg %p24
      %p31 = scmp.eq.s32.totalorder %s15, 1
      %p32 = por %p30, %p31
      %p33 = scmp.ne.s32.totalorder %s25, %s28
      %p34 = scmp.eq.s32.totalorder %s15, 0
      %p35 = por %p33, %p34
      %p36 = scmp.ne.s32.totalorder %s25, %s28
      %p37 = scmp.eq.s32.totalorder %s20, 1
      %p38 = por %p36, %p37
      %p39 = scmp.ne.s32.totalorder %s28, %s29
      %p40 = scmp.eq.s32.totalorder %s20, 0
      %p41 = por %p39, %p40
      %p42 = scmp.ne.s32.totalorder %s28, %s29
      %p43 = scmp.eq.s32.totalorder %s21, 1
      %p44 = por %p42, %p43
      %p46 = scmp.ne.s32.totalorder %s29, %s45
      %p47 = scmp.eq.s32.totalorder %s21, 0
      %p48 = por %p46, %p47
      %s49 = ssub.s32 %s15, %s22
      %p50 = scmp.eq.s32.totalorder %s49, 0
      %s52 = sadd.s32 %s51, 1
      %s53 = scalar_select %p50, %s51, %s52
      %p56 = pneg %p50
      %p57 = scmp.eq.s32.totalorder %s15, 1
      %p58 = por %p56, %p57
      %p59 = scmp.ne.s32.totalorder %s51, %s54
      %p60 = scmp.eq.s32.totalorder %s15, 0
      %p61 = por %p59, %p60
      %p62 = scmp.ne.s32.totalorder %s51, %s54
      %p63 = scmp.eq.s32.totalorder %s20, 1
      %p64 = por %p62, %p63
      %p65 = scmp.ne.s32.totalorder %s54, %s55
      %p66 = scmp.eq.s32.totalorder %s20, 0
      %p67 = por %p65, %p66
      %p68 = scmp.ne.s32.totalorder %s54, %s55
      %p69 = scmp.eq.s32.totalorder %s21, 1
      %p70 = por %p68, %p69
      %p72 = scmp.ne.s32.totalorder %s55, %s71
      %p73 = scmp.eq.s32.totalorder %s21, 0
      %p74 = por %p72, %p73
      %s76 = sadd.s32 %s75, 1
      %p79 = scmp.eq.s32.totalorder %s15, 1
      %p80 = scmp.ne.s32.totalorder %s75, %s77
      %p81 = scmp.eq.s32.totalorder %s15, 0
      %p82 = por %p80, %p81
      %p83 = scmp.ne.s32.totalorder %s75, %s77
      %p84 = scmp.eq.s32.totalorder %s20, 1
      %p85 = por %p83, %p84
      %p86 = scmp.ne.s32.totalorder %s77, %s78
      %p87 = scmp.eq.s32.totalorder %s20, 0
      %p88 = por %p86, %p87
      %p89 = scmp.ne.s32.totalorder %s77, %s78
      %p90 = scmp.eq.s32.totalorder %s21, 1
      %p91 = por %p89, %p90
      %p93 = scmp.ne.s32.totalorder %s78, %s92
      %p94 = scmp.eq.s32.totalorder %s21, 0
      %p95 = por %p93, %p94
      %p96 = scmp.le.s32.totalorder 1, %s15
      %p97 = scmp.lt.s32.totalorder %s15, 3
      %p98 = pnand %p96, %p97
      %p99 = pneg %p98
      // Predicated region
      $region9: #{tpu_custom_call.1} parent=5 // pred_check
        _
      $region10: #{tpu_custom_call.1} parent=5 // pred_check_branch
        %101 = sbr.rel (%p98) target = $region12
      $region11: #{tpu_custom_call.1} parent=5 // pred_region
        %s102 = ssub.s32 %s15, 1
      $region12: #{tpu_custom_call.1} parent=5 // pred_fallthru
        _
      %p103 = scmp.lt.s32.totalorder %s15, 2
      // Predicated region
      $region13: #{tpu_custom_call.1} parent=5 // pred_check
        %p104 = pneg %p103
      $region14: #{tpu_custom_call.1} parent=5 // pred_check_branch
        %106 = sbr.rel (%p104) target = $region16
      $region15: #{tpu_custom_call.1} parent=5 // pred_region
        // Predicated region
        $region17: #{tpu_custom_call.1} parent=15 // pred_check
          %p107 = pneg %p35
        $region18: #{tpu_custom_call.1} parent=15 // pred_check_branch
          %109 = sbr.rel (%p107) target = $region20
        $region19: #{tpu_custom_call.1} parent=15 // pred_region
          %s110 = sand.u32 %s25, 1
          %s111 = scalar_lea.sflag [#allocation4], %s110
          %s112 = sand.u32 %s25, 1
          %s113 = smul.addr %s112, 8
          %s114 = scalar_lea.vmem [#allocation3], %s113
          %s116 = ssub.s32 128, 128
          %117 = vsyncadd %s111, %s116
          %s118 = smul.addr %s15, 128
          %s119 = scalar_lea.hbm %s0, %s118
          %s121 = sshll.u32 %s114, 4
          %s122 = int_to_ptr.vmem [resolvable:$true] %s121
          %124 = dma.hbm_to_vmem [thread:$0]  %s119, 128, %s122, %s111
        $region20: #{tpu_custom_call.1} parent=15 // pred_fallthru
          _
        // Predicated region
        $region21: #{tpu_custom_call.1} parent=15 // pred_check
          %p125 = pneg %p61
        $region22: #{tpu_custom_call.1} parent=15 // pred_check_branch
          %127 = sbr.rel (%p125) target = $region24
        $region23: #{tpu_custom_call.1} parent=15 // pred_region
          %s128 = sand.u32 %s51, 1
          %s129 = scalar_lea.sflag [#allocation7], %s128
          %s130 = sand.u32 %s51, 1
          %s131 = smul.addr %s130, 8
          %s132 = scalar_lea.vmem [#allocation6], %s131
          %s134 = ssub.s32 128, 128
          %135 = vsyncadd %s129, %s134
          %s136 = smul.addr %s15, 128
          %s137 = scalar_lea.hbm %s1, %s136
          %s139 = sshll.u32 %s132, 4
          %s140 = int_to_ptr.vmem [resolvable:$true] %s139
          %142 = dma.hbm_to_vmem [thread:$0]  %s137, 128, %s140, %s129
        $region24: #{tpu_custom_call.1} parent=15 // pred_fallthru
          _
      $region16: #{tpu_custom_call.1} parent=5 // pred_fallthru
        _
      %p143 = scmp.le.s32.totalorder 1, %s15
      %p144 = scmp.lt.s32.totalorder %s15, 3
      %p145 = pnand %p143, %p144
      %p146 = pneg %p145
      // Predicated region
      $region25: #{tpu_custom_call.1} parent=5 // pred_check
        _
      $region26: #{tpu_custom_call.1} parent=5 // pred_check_branch
        %148 = sbr.rel (%p145) target = $region28
      $region27: #{tpu_custom_call.1} parent=5 // pred_region
        %s149 = ssub.s32 %s15, 1
        %s150 = sand.u32 %s28, 1
        %s151 = scalar_lea.sflag [#allocation4], %s150
        %s152 = sand.u32 %s28, 1
        %s153 = smul.addr %s152, 8
        %s154 = scalar_lea.vmem [#allocation3], %s153
        // Predicated region
        $region29: #{tpu_custom_call.1} parent=27 // pred_check
          %p155 = pneg %p41
        $region30: #{tpu_custom_call.1} parent=27 // pred_check_branch
          %157 = sbr.rel (%p155) target = $region32
        $region31: #{tpu_custom_call.1} parent=27 // pred_region
          %158 = dma.done %s151, 128
        $region32: #{tpu_custom_call.1} parent=27 // pred_fallthru
          _
        %s159 = sand.u32 %s54, 1
        %s160 = scalar_lea.sflag [#allocation7], %s159
        %s161 = sand.u32 %s54, 1
        %s162 = smul.addr %s161, 8
        %s163 = scalar_lea.vmem [#allocation6], %s162
        // Predicated region
        $region33: #{tpu_custom_call.1} parent=27 // pred_check
          %p164 = pneg %p67
        $region34: #{tpu_custom_call.1} parent=27 // pred_check_branch
          %166 = sbr.rel (%p164) target = $region36
        $region35: #{tpu_custom_call.1} parent=27 // pred_region
          %167 = dma.done %s160, 128
        $region36: #{tpu_custom_call.1} parent=27 // pred_fallthru
          _
        %s168 = sand.u32 %s28, 1
        %s169 = scalar_lea.sflag [#allocation4], %s168
        %s170 = sand.u32 %s28, 1
        %s171 = smul.addr %s170, 8
        %s172 = scalar_lea.vmem [#allocation3], %s171
        %p173 = pneg %p41
        %p174 = pneg %p38
        %s175 = sand.u32 %s54, 1
        %s176 = scalar_lea.sflag [#allocation7], %s175
        %s177 = sand.u32 %s54, 1
        %s178 = smul.addr %s177, 8
        %s179 = scalar_lea.vmem [#allocation6], %s178
        %p180 = pneg %p67
        %p181 = pneg %p64
        %p182 = pneg %p88
        %p183 = pneg %p85
        %p184 = scmp.eq.s32.totalorder %s20, 0
        // Predicated region
        $region37: #{tpu_custom_call.1} parent=27 // pred_check
          %p185 = pneg %p184
        $region38: #{tpu_custom_call.1} parent=27 // pred_check_branch
          %187 = sbr.rel (%p185) target = $region40
        $region39: #{tpu_custom_call.1} parent=27 // pred_region
          %vm188 = vcmask 7168
          %189 = vst.msk [vmem:[#allocation2] sm:$0xff] %vm188, 0.0
        $region40: #{tpu_custom_call.1} parent=27 // pred_fallthru
          _
        %v190 = vld [vmem:[%s154] sm:$0xff]
        %v191 = vld [vmem:[%s163] sm:$0xff]
        %v192 = vadd.f32 %v190, %v191
        %v193 = vmul.f32 %v192, 0.5
        %194 = vmax.xlane.f32.xlu0 %v190
        %v195 = vpop.xlane.xlu0 %194
        %v196 = vsub.f32 %v190, %v195
        %v197 = vmul.f32 %v196, 1.442695
        %v198 = vpow.pop %v197
        %199 = vadd.xlane.f32.xlu0 %v198
        %v200 = vpop.xlane.xlu0 %199
        %v201 = vlog2.pop %v200
        %v202 = vmul.f32 %v201, 0.6931472
        %v203 = vsub.f32 %v196, %v202
        %204 = vmax.xlane.f32.xlu0 %v191
        %v205 = vpop.xlane.xlu0 %204
        %v206 = vsub.f32 %v191, %v205
        %v207 = vmul.f32 %v206, 1.442695
        %v208 = vpow.pop %v207
        %209 = vadd.xlane.f32.xlu0 %v208
        %v210 = vpop.xlane.xlu0 %209
        %v211 = vlog2.pop %v210
        %v212 = vmul.f32 %v211, 0.6931472
        %v213 = vsub.f32 %v206, %v212
        %214 = vmax.xlane.f32.xlu0 %v193
        %v215 = vpop.xlane.xlu0 %214
        %v216 = vsub.f32 %v193, %v215
        %v217 = vmul.f32 %v216, 1.442695
        %v218 = vpow.pop %v217
        %219 = vadd.xlane.f32.xlu0 %v218
        %v220 = vpop.xlane.xlu0 %219
        %v221 = vlog2.pop %v220
        %v222 = vmul.f32 %v221, 0.6931472
        %v223 = vsub.f32 %v216, %v222
        %v224 = vmul.f32 %v203, 1.442695
        %v225 = vpow.pop %v224
        %v226 = vsub.f32 %v203, %v223
        %v227 = vmul.f32 %v225, %v226
        %v228 = vmul.f32 %v213, 1.442695
        %v229 = vpow.pop %v228
        %v230 = vsub.f32 %v213, %v223
        %v231 = vmul.f32 %v229, %v230
        %v232 = vadd.f32 %v227, %v231
        %v233 = vld [vmem:[#allocation2] sm:$0xff]
        %234 = vadd.xlane.f32.xlu0 %v232
        %v235 = vpop.xlane.xlu0 %234
        %v236 = vadd.f32 %v233, %v235
        %vm237 = vcmask 7168
        %238 = vst.msk [vmem:[#allocation2] sm:$0xff] %vm237, %v236
        %p239 = scmp.eq.s32.totalorder %s20, 1
        // Predicated region
        $region41: #{tpu_custom_call.1} parent=27 // pred_check
          %p240 = pneg %p239
        $region42: #{tpu_custom_call.1} parent=27 // pred_check_branch
          %242 = sbr.rel (%p240) target = $region44
        $region43: #{tpu_custom_call.1} parent=27 // pred_region
          %v243 = vld [vmem:[#allocation2] sm:$0xff]
          %v244 = vsel %vm237, %v243, 0.0
          %245 = vadd.xlane.f32.xlu0 %v244
          %v246 = vpop.xlane.xlu0 %245
          %v247 = vrot.slane %v246, 4
          %v248 = vadd.f32 %v246, %v247
          %v249 = vrot.slane %v248, 2
          %v250 = vadd.f32 %v248, %v249
          %v251 = vrot.slane %v250, 1
          %v252 = vadd.f32 %v250, %v251
          %s253 = vtos %v252
          %s254 = smul.f32 %s253, 0.5
          %s255 = scalar_lea.smem [#allocation8], 0
          %256 = sst [smem:[%s255]] %s254
        $region44: #{tpu_custom_call.1} parent=27 // pred_fallthru
          _
        // Predicated region
        $region45: #{tpu_custom_call.1} parent=27 // pred_check
          %p257 = pneg %p85
        $region46: #{tpu_custom_call.1} parent=27 // pred_check_branch
          %259 = sbr.rel (%p257) target = $region48
        $region47: #{tpu_custom_call.1} parent=27 // pred_region
          %s261 = ssub.s32 16, 16
          %262 = vsyncadd [#allocation5], %s261
          %265 = dma.smem_to_hbm [#allocation8], 16, %s2, [#allocation5]
        $region48: #{tpu_custom_call.1} parent=27 // pred_fallthru
          _
        // Predicated region
        $region49: #{tpu_custom_call.1} parent=27 // pred_check
          %p266 = pneg %p85
        $region50: #{tpu_custom_call.1} parent=27 // pred_check_branch
          %268 = sbr.rel (%p266) target = $region52
        $region51: #{tpu_custom_call.1} parent=27 // pred_region
          %269 = dma.done [#allocation5], 16
        $region52: #{tpu_custom_call.1} parent=27 // pred_fallthru
          _
        %270 = sfence
      $region28: #{tpu_custom_call.1} parent=5 // pred_fallthru
        _
      %p271 = scmp.le.s32.totalorder 2, %s15
      // Predicated region
      $region53: #{tpu_custom_call.1} parent=5 // pred_check
        %p272 = pneg %p271
      $region54: #{tpu_custom_call.1} parent=5 // pred_check_branch
        %274 = sbr.rel (%p272) target = $region56
      $region55: #{tpu_custom_call.1} parent=5 // pred_region
        %s275 = ssub.s32 %s15, 2
      $region56: #{tpu_custom_call.1} parent=5 // pred_fallthru
        _
    $region6: #{tpu_custom_call.1} parent=1 // loop_footer
      %s19 = sadd.s32 1, %s15
    $region7: #{tpu_custom_call.1} parent=1 // loop_footer_branch
      %14 = sbr.rel target = $region3
    $region8: #{tpu_custom_call.1} parent=1 // loop_exit
      _
    %276 = vsyncpa [#allocation4], 1
    %s277 = scalar_lea.sflag [#allocation4], 1
    %278 = vsyncpa %s277, 1
    %279 = vsyncpa [#allocation7], 1
    %s280 = scalar_lea.sflag [#allocation7], 1
    %281 = vsyncpa %s280, 1
    %282 = vsyncpa [#allocation5], 1
    %s283 = scalar_lea.sflag [#allocation5], 1
    %284 = vsyncpa %s283, 1

</llo_original>
